<compile_context>
chip_gen: v6e
topology: v6e:2x2x1
jax: 0.10.0
libtpu: 0.0.40
codegen_flags: <defaults>
</compile_context>

<pallas_src>
import functools

import jax
import jax.numpy as jnp
from jax.experimental import pallas as pl
from jax.experimental.pallas import tpu as pltpu


def _attention_kernel(hid_ref, enc_ref,
                      w1e_ref, w1h_ref, b1_ref,
                      w2_ref, b2_ref, w3_ref, b3_ref,
                      w4v_ref, b4v_ref,
                      ctx_ref, *, seq_len):
    """One grid step processes TB batch elements (= TB*seq_len rows)."""
    TB, H = hid_ref.shape
    S = seq_len
    R = TB * S

    f32 = jnp.float32
    wd = w2_ref.dtype                       # MXU operand dtype (f32 or bf16)

    enc = enc_ref[...]                      # (TB*S, H), rows flattened for MXU
    hid = hid_ref[...]                      # (TB, H)

    # ---- Layer 1 without the lane-axis concat -----------------------------
    # cat([enc, hid]) @ W1 + b1  ==  enc @ W1_enc + (hid @ W1_hid + b1)
    # The hidden term is rank-1 across the sequence: compute it once per batch
    # row and broadcast-add over S.
    hid_term = jnp.dot(hid.astype(wd), w1h_ref[...],
                       preferred_element_type=f32) + b1_ref[...]        # (TB, H)
    x = jnp.dot(enc.astype(wd), w1e_ref[...],
                preferred_element_type=f32)                             # (R, H)
    x = (x.reshape(TB, S, H) + hid_term[:, None, :]).reshape(R, H)

    # ---- Layers 2..3 on the full row slab (hot MXU path) -------------------
    x = jnp.dot(x.astype(wd), w2_ref[...], preferred_element_type=f32) + b2_ref[...]
    x = jnp.dot(x.astype(wd), w3_ref[...], preferred_element_type=f32) + b3_ref[...]

    # ---- Fused L4 + to_weight head -----------------------------------------
    # scores = (x3 @ W4 + b4) @ wv == x3 @ (W4 @ wv) + (b4 @ wv)
    # (W4 @ wv) is precomputed in the wrapper as a (1, H) row; the per-row dot
    # becomes a VPU multiply + lane reduce — no N=1 matmul, no x4 slab.
    w4v_row = w4v_ref[...]                                              # (1, H)
    x3 = x.reshape(TB, S, H)
    scores = jnp.sum(x3 * w4v_row[None, :, :], axis=-1, keepdims=True)  # (TB, S, 1)
    scores = scores + b4v_ref[...][None]                                # + b4 @ wv

    # ---- Softmax over the sequence axis, per batch element -----------------
    m = jnp.max(scores, axis=1, keepdims=True)                          # (TB, 1, 1)
    p = jnp.exp(scores - m)
    attn = p / jnp.sum(p, axis=1, keepdims=True)                        # (TB, S, 1)

    # ---- Context: VPU multiply + reduce over S (no M=1 matmul/transpose) ---
    enc3 = enc.reshape(TB, S, H).astype(f32)
    ctx = jnp.sum(attn * enc3, axis=1)                                  # (TB, H)
    ctx_ref[...] = ctx.astype(ctx_ref.dtype)


def _vmem_limit_bytes(TB, S, H):
    itemsize = 4
    weights = (4 * H * H + 4 * H + 1) * itemsize         # resident weights + biases
    blocks = (TB * S * H + 2 * TB * H) * itemsize        # enc / hid / ctx tiles
    scratch = 4 * TB * S * H * itemsize                  # f32 intermediates headroom
    est = 2 * (weights + blocks) + scratch                # pipeline double-buffering
    return int(min(max(4 * est, 16 * 1024 * 1024), 48 * 1024 * 1024))


def attention_forward(hidden_state, encoder_outputs, params, *,
                      row_target=256, compute_dtype=None):
    """hidden_state: (B, H), encoder_outputs: (B, S, H).

    compute_dtype: optional (e.g. jnp.bfloat16) dtype for the MXU operands on
    v6e/v7x; accumulation stays f32. Default None keeps full f32 so the 1e-5
    reference tolerance holds.
    """
    B, S, H = encoder_outputs.shape
    (w1, b1, w2, b2, w3, b3, w4, b4, wv) = params

    # Split linear1 so the kernel never materializes the (rows, 2H) concat:
    # cat([enc, hid], -1) @ W1 == enc @ W1[:H] + hid @ W1[H:]
    w1_enc, w1_hid = w1[:H, :], w1[H:, :]

    # Fuse linear4 with the rank-1 score head (precomputed once, O(H^2)):
    #   (x3 @ W4 + b4) @ wv == x3 @ (W4 @ wv) + b4 @ wv
    w4v_row = (w4 @ wv).reshape(1, H)
    b4v = (b4 @ wv).reshape(1, 1)

    if compute_dtype is not None:
        w1_enc = w1_enc.astype(compute_dtype)
        w1_hid = w1_hid.astype(compute_dtype)
        w2 = w2.astype(compute_dtype)
        w3 = w3.astype(compute_dtype)
        # biases / w4v stay f32: they live on the f32 accumulate / reduce path.

    # Pick a batch tile so each linear feeds the MXU with >= row_target rows
    # and blocks stay (8,128)-friendly. Pad B up if needed (padded rows are
    # zeros -> harmless softmax/context, sliced off at the end).
    tb = max(1, row_target // S)
    if tb >= B:
        TB, B_pad = B, B
    else:
        TB = max(8, (tb // 8) * 8)
        B_pad = ((B + TB - 1) // TB) * TB

    if B_pad != B:
        pad = B_pad - B
        hidden_state = jnp.pad(hidden_state, ((0, pad), (0, 0)))
        encoder_outputs = jnp.pad(encoder_outputs, ((0, pad), (0, 0), (0, 0)))

    # Flatten (B, S, H) -> (B*S, H) in the wrapper: the kernel's matmul LHS is
    # a dense row slab with H on the lane axis (layout plumbing, not compute).
    enc_flat = encoder_outputs.reshape(B_pad * S, H)

    full = lambda shape: pl.BlockSpec(shape, lambda i: (0, 0))
    kernel = functools.partial(_attention_kernel, seq_len=S)

    out = pl.pallas_call(
        kernel,
        out_shape=jax.ShapeDtypeStruct((B_pad, H), encoder_outputs.dtype),
        grid_spec=pltpu.PrefetchScalarGridSpec(
            num_scalar_prefetch=0,
            grid=(B_pad // TB,),
            in_specs=[
                pl.BlockSpec((TB, H), lambda i: (i, 0)),        # hidden_state tile
                pl.BlockSpec((TB * S, H), lambda i: (i, 0)),    # encoder rows tile
                full((H, H)), full((H, H)), full((1, H)),       # linear1 (split) + b1
                full((H, H)), full((1, H)),                     # linear2
                full((H, H)), full((1, H)),                     # linear3
                full((1, H)), full((1, 1)),                     # fused W4 @ wv, b4 @ wv
            ],
            out_specs=pl.BlockSpec((TB, H), lambda i: (i, 0)),
        ),
        compiler_params=pltpu.CompilerParams(
            dimension_semantics=("parallel",),
            vmem_limit_bytes=_vmem_limit_bytes(TB, S, H),
        ),
    )(hidden_state, enc_flat,
      w1_enc, w1_hid, b1, w2, b2, w3, b3, w4v_row, b4v)

    return out[:B]


def init_params(key, dim_hidden):
    """Deterministic synthetic weights. torch Linear weight is (out, in);
    we store the transpose (in, out) so the kernel does x @ W + b."""
    ks = jax.random.split(key, 9)
    H = dim_hidden

    def lin(kw, in_f, out_f):
        bound = 1.0 / jnp.sqrt(in_f)
        return jax.random.uniform(kw, (in_f, out_f), jnp.float32, -bound, bound)

    w1 = lin(ks[0], 2 * H, H)
    b1 = jax.random.uniform(ks[1], (1, H), jnp.float32, -1.0, 1.0) * (1.0 / jnp.sqrt(2 * H))
    w2 = lin(ks[2], H, H)
    b2 = jax.random.uniform(ks[3], (1, H), jnp.float32, -1.0, 1.0) * (1.0 / jnp.sqrt(H))
    w3 = lin(ks[4], H, H)
    b3 = jax.random.uniform(ks[5], (1, H), jnp.float32, -1.0, 1.0) * (1.0 / jnp.sqrt(H))
    w4 = lin(ks[6], H, H)
    b4 = jax.random.uniform(ks[7], (1, H), jnp.float32, -1.0, 1.0) * (1.0 / jnp.sqrt(H))
    wv = lin(ks[8], H, 1)
    return (w1, b1, w2, b2, w3, b3, w4, b4, wv)


def attention_reference(hidden_state, encoder_outputs, params):
    """Pure-JAX reference mirroring the PyTorch forward exactly."""
    (w1, b1, w2, b2, w3, b3, w4, b4, wv) = params
    B, S, H = encoder_outputs.shape
    hid = jnp.broadcast_to(hidden_state[:, None, :], (B, S, H))
    x = jnp.concatenate([encoder_outputs, hid], axis=2).reshape(-1, 2 * H)
    x = x @ w1 + b1
    x = x @ w2 + b2
    x = x @ w3 + b3
    x = x @ w4 + b4
    scores = (x @ wv).reshape(B, S)
    attn = jax.nn.softmax(scores, axis=1)
    ctx = jnp.einsum("bs,bsh->bh", attn, encoder_outputs)
    return ctx


if __name__ == "__main__":
    B, S, H = 2, 8, 32  # batch, seq_len, dim_hidden

    key = jax.random.PRNGKey(0)
    k_hid, k_enc, k_par = jax.random.split(key, 3)

    hidden_state = jax.random.normal(k_hid, (B, H), dtype=jnp.float32)
    encoder_outputs = jax.random.normal(k_enc, (B, S, H), dtype=jnp.float32)
    params = init_params(k_par, H)

    ctx = attention_forward(hidden_state, encoder_outputs, params)
    ctx = jax.block_until_ready(ctx)

    ref = attention_reference(hidden_state, encoder_outputs, params)
    assert ctx.shape == (B, H)
    assert jnp.allclose(ctx, ref, atol=1e-5, rtol=1e-5), "mismatch vs reference"

    print("KERNEL_OK")
</pallas_src>

<mosaic_0001>
module attributes {stable_mosaic.version = 11 : i64} {
  func.func @_attention_kernel(%arg0: i32, %arg1: memref<2x32xf32, #tpu.memory_space<vmem>>, %arg2: memref<16x32xf32, #tpu.memory_space<vmem>>, %arg3: memref<32x32xf32, #tpu.memory_space<vmem>>, %arg4: memref<32x32xf32, #tpu.memory_space<vmem>>, %arg5: memref<1x32xf32, #tpu.memory_space<vmem>>, %arg6: memref<32x32xf32, #tpu.memory_space<vmem>>, %arg7: memref<1x32xf32, #tpu.memory_space<vmem>>, %arg8: memref<32x32xf32, #tpu.memory_space<vmem>>, %arg9: memref<1x32xf32, #tpu.memory_space<vmem>>, %arg10: memref<1x32xf32, #tpu.memory_space<vmem>>, %arg11: memref<1x1xf32, #tpu.memory_space<vmem>>, %arg12: memref<2x32xf32, #tpu.memory_space<vmem>>) attributes {dimension_semantics = [#tpu.dimension_semantics<parallel>], iteration_bounds = array<i64: 1>, scalar_prefetch = 0 : i64, scratch_operands = 0 : i64, tpu.core_type = #tpu.core_type<tc>, window_params = [{transform_indices = @transform_0, window_bounds = array<i64: 2, 32>}, {transform_indices = @transform_1, window_bounds = array<i64: 16, 32>}, {pipeline_mode = #tpu.pipeline_mode<synchronous>, transform_indices = @transform_2, window_bounds = array<i64: 32, 32>}, {pipeline_mode = #tpu.pipeline_mode<synchronous>, transform_indices = @transform_3, window_bounds = array<i64: 32, 32>}, {pipeline_mode = #tpu.pipeline_mode<synchronous>, transform_indices = @transform_4, window_bounds = array<i64: 1, 32>}, {pipeline_mode = #tpu.pipeline_mode<synchronous>, transform_indices = @transform_5, window_bounds = array<i64: 32, 32>}, {pipeline_mode = #tpu.pipeline_mode<synchronous>, transform_indices = @transform_6, window_bounds = array<i64: 1, 32>}, {pipeline_mode = #tpu.pipeline_mode<synchronous>, transform_indices = @transform_7, window_bounds = array<i64: 32, 32>}, {pipeline_mode = #tpu.pipeline_mode<synchronous>, transform_indices = @transform_8, window_bounds = array<i64: 1, 32>}, {pipeline_mode = #tpu.pipeline_mode<synchronous>, transform_indices = @transform_9, window_bounds = array<i64: 1, 32>}, {pipeline_mode = #tpu.pipeline_mode<synchronous>, transform_indices = @transform_10, window_bounds = array<i64: 1, 1>}, {transform_indices = @transform_11, window_bounds = array<i64: 2, 32>}]} {
    %c0 = arith.constant 0 : index
    %c0_0 = arith.constant 0 : index
    %0 = vector.load %arg2[%c0, %c0_0] : memref<16x32xf32, #tpu.memory_space<vmem>>, vector<16x32xf32>
    %c0_1 = arith.constant 0 : index
    %c0_2 = arith.constant 0 : index
    %1 = vector.load %arg1[%c0_1, %c0_2] : memref<2x32xf32, #tpu.memory_space<vmem>>, vector<2x32xf32>
    %c0_3 = arith.constant 0 : index
    %c0_4 = arith.constant 0 : index
    %2 = vector.load %arg4[%c0_3, %c0_4] : memref<32x32xf32, #tpu.memory_space<vmem>>, vector<32x32xf32>
    %cst = arith.constant dense<0.000000e+00> : vector<2x32xf32>
    %3 = tpu.matmul %1, %2, %cst {dimension_numbers = #tpu.dot_dimension_numbers<[1], [0], [0], [1], [0, 0, 1, 1], [], []>} : vector<2x32xf32>, vector<32x32xf32>, vector<2x32xf32> -> vector<2x32xf32>
    %c0_5 = arith.constant 0 : index
    %c0_6 = arith.constant 0 : index
    %4 = vector.load %arg5[%c0_5, %c0_6] : memref<1x32xf32, #tpu.memory_space<vmem>>, vector<1x32xf32>
    %5 = vector.broadcast %4 : vector<1x32xf32> to vector<2x32xf32>
    %6 = arith.addf %3, %5 : vector<2x32xf32>
    %c0_7 = arith.constant 0 : index
    %c0_8 = arith.constant 0 : index
    %7 = vector.load %arg3[%c0_7, %c0_8] : memref<32x32xf32, #tpu.memory_space<vmem>>, vector<32x32xf32>
    %cst_9 = arith.constant dense<0.000000e+00> : vector<16x32xf32>
    %8 = tpu.matmul %0, %7, %cst_9 {dimension_numbers = #tpu.dot_dimension_numbers<[1], [0], [0], [1], [0, 0, 1, 1], [], []>} : vector<16x32xf32>, vector<32x32xf32>, vector<16x32xf32> -> vector<16x32xf32>
    %9 = vector.shape_cast %8 : vector<16x32xf32> to vector<2x8x32xf32>
    %10 = vector.shape_cast %6 : vector<2x32xf32> to vector<2x1x32xf32>
    %11 = vector.broadcast %10 : vector<2x1x32xf32> to vector<2x8x32xf32>
    %12 = arith.addf %9, %11 : vector<2x8x32xf32>
    %13 = vector.shape_cast %12 : vector<2x8x32xf32> to vector<16x32xf32>
    %c0_10 = arith.constant 0 : index
    %c0_11 = arith.constant 0 : index
    %14 = vector.load %arg6[%c0_10, %c0_11] : memref<32x32xf32, #tpu.memory_space<vmem>>, vector<32x32xf32>
    %cst_12 = arith.constant dense<0.000000e+00> : vector<16x32xf32>
    %15 = tpu.matmul %13, %14, %cst_12 {dimension_numbers = #tpu.dot_dimension_numbers<[1], [0], [0], [1], [0, 0, 1, 1], [], []>} : vector<16x32xf32>, vector<32x32xf32>, vector<16x32xf32> -> vector<16x32xf32>
    %c0_13 = arith.constant 0 : index
    %c0_14 = arith.constant 0 : index
    %16 = vector.load %arg7[%c0_13, %c0_14] : memref<1x32xf32, #tpu.memory_space<vmem>>, vector<1x32xf32>
    %17 = vector.broadcast %16 : vector<1x32xf32> to vector<16x32xf32>
    %18 = arith.addf %15, %17 : vector<16x32xf32>
    %c0_15 = arith.constant 0 : index
    %c0_16 = arith.constant 0 : index
    %19 = vector.load %arg8[%c0_15, %c0_16] : memref<32x32xf32, #tpu.memory_space<vmem>>, vector<32x32xf32>
    %cst_17 = arith.constant dense<0.000000e+00> : vector<16x32xf32>
    %20 = tpu.matmul %18, %19, %cst_17 {dimension_numbers = #tpu.dot_dimension_numbers<[1], [0], [0], [1], [0, 0, 1, 1], [], []>} : vector<16x32xf32>, vector<32x32xf32>, vector<16x32xf32> -> vector<16x32xf32>
    %c0_18 = arith.constant 0 : index
    %c0_19 = arith.constant 0 : index
    %21 = vector.load %arg9[%c0_18, %c0_19] : memref<1x32xf32, #tpu.memory_space<vmem>>, vector<1x32xf32>
    %22 = vector.broadcast %21 : vector<1x32xf32> to vector<16x32xf32>
    %23 = arith.addf %20, %22 : vector<16x32xf32>
    %c0_20 = arith.constant 0 : index
    %c0_21 = arith.constant 0 : index
    %24 = vector.load %arg10[%c0_20, %c0_21] : memref<1x32xf32, #tpu.memory_space<vmem>>, vector<1x32xf32>
    %25 = vector.shape_cast %23 : vector<16x32xf32> to vector<2x8x32xf32>
    %26 = vector.shape_cast %24 : vector<1x32xf32> to vector<1x1x32xf32>
    %27 = vector.broadcast %26 : vector<1x1x32xf32> to vector<2x8x32xf32>
    %28 = arith.mulf %25, %27 : vector<2x8x32xf32>
    %cst_22 = arith.constant dense<0.000000e+00> : vector<2x8xf32>
    %29 = vector.multi_reduction <add>, %28, %cst_22 [2] : vector<2x8x32xf32> to vector<2x8xf32>
    %30 = vector.shape_cast %29 : vector<2x8xf32> to vector<2x8x1xf32>
    %c0_23 = arith.constant 0 : index
    %c0_24 = arith.constant 0 : index
    %31 = vector.load %arg11[%c0_23, %c0_24] : memref<1x1xf32, #tpu.memory_space<vmem>>, vector<1x1xf32>
    %32 = vector.shape_cast %31 : vector<1x1xf32> to vector<1x1x1xf32>
    %33 = vector.broadcast %32 : vector<1x1x1xf32> to vector<2x8x1xf32>
    %34 = arith.addf %30, %33 : vector<2x8x1xf32>
    %cst_25 = arith.constant dense<0xFF800000> : vector<2x1xf32>
    %35 = vector.multi_reduction <maximumf>, %34, %cst_25 [1] : vector<2x8x1xf32> to vector<2x1xf32>
    %36 = vector.shape_cast %35 : vector<2x1xf32> to vector<2x1x1xf32>
    %37 = vector.broadcast %36 : vector<2x1x1xf32> to vector<2x8x1xf32>
    %38 = arith.subf %34, %37 : vector<2x8x1xf32>
    %39 = math.exp %38 : vector<2x8x1xf32>
    %cst_26 = arith.constant dense<0.000000e+00> : vector<2x1xf32>
    %40 = vector.multi_reduction <add>, %39, %cst_26 [1] : vector<2x8x1xf32> to vector<2x1xf32>
    %41 = vector.shape_cast %40 : vector<2x1xf32> to vector<2x1x1xf32>
    %42 = vector.broadcast %41 : vector<2x1x1xf32> to vector<2x8x1xf32>
    %43 = arith.divf %39, %42 : vector<2x8x1xf32>
    %44 = vector.shape_cast %0 : vector<16x32xf32> to vector<2x8x32xf32>
    %45 = vector.broadcast %43 : vector<2x8x1xf32> to vector<2x8x32xf32>
    %46 = arith.mulf %45, %44 : vector<2x8x32xf32>
    %cst_27 = arith.constant dense<0.000000e+00> : vector<2x32xf32>
    %47 = vector.multi_reduction <add>, %46, %cst_27 [1] : vector<2x8x32xf32> to vector<2x32xf32>
    %c0_28 = arith.constant 0 : index
    %c0_29 = arith.constant 0 : index
    %48 = vector.load %arg12[%c0_28, %c0_29] : memref<2x32xf32, #tpu.memory_space<vmem>>, vector<2x32xf32>
    tpu.vector_store %arg12[%c0_28, %c0_29], %47 {strides = array<i32>} : memref<2x32xf32, #tpu.memory_space<vmem>>, vector<2x32xf32>,
    return
  }
  func.func @transform_0(%arg0: i32) -> (i32, i32) {
    %c0_i32 = arith.constant 0 : i32
    %c0_i32_0 = arith.constant 0 : i32
    return %arg0, %c0_i32 : i32, i32
  }
  func.func @transform_1(%arg0: i32) -> (i32, i32) {
    %c0_i32 = arith.constant 0 : i32
    %c0_i32_0 = arith.constant 0 : i32
    return %arg0, %c0_i32 : i32, i32
  }
  func.func @transform_2(%arg0: i32) -> (i32, i32) {
    %c0_i32 = arith.constant 0 : i32
    %c0_i32_0 = arith.constant 0 : i32
    %c0_i32_1 = arith.constant 0 : i32
    return %c0_i32, %c0_i32_0 : i32, i32
  }
  func.func @transform_3(%arg0: i32) -> (i32, i32) {
    %c0_i32 = arith.constant 0 : i32
    %c0_i32_0 = arith.constant 0 : i32
    %c0_i32_1 = arith.constant 0 : i32
    return %c0_i32, %c0_i32_0 : i32, i32
  }
  func.func @transform_4(%arg0: i32) -> (i32, i32) {
    %c0_i32 = arith.constant 0 : i32
    %c0_i32_0 = arith.constant 0 : i32
    %c0_i32_1 = arith.constant 0 : i32
    return %c0_i32, %c0_i32_0 : i32, i32
  }
  func.func @transform_5(%arg0: i32) -> (i32, i32) {
    %c0_i32 = arith.constant 0 : i32
    %c0_i32_0 = arith.constant 0 : i32
    %c0_i32_1 = arith.constant 0 : i32
    return %c0_i32, %c0_i32_0 : i32, i32
  }
  func.func @transform_6(%arg0: i32) -> (i32, i32) {
    %c0_i32 = arith.constant 0 : i32
    %c0_i32_0 = arith.constant 0 : i32
    %c0_i32_1 = arith.constant 0 : i32
    return %c0_i32, %c0_i32_0 : i32, i32
  }
  func.func @transform_7(%arg0: i32) -> (i32, i32) {
    %c0_i32 = arith.constant 0 : i32
    %c0_i32_0 = arith.constant 0 : i32
    %c0_i32_1 = arith.constant 0 : i32
    return %c0_i32, %c0_i32_0 : i32, i32
  }
  func.func @transform_8(%arg0: i32) -> (i32, i32) {
    %c0_i32 = arith.constant 0 : i32
    %c0_i32_0 = arith.constant 0 : i32
    %c0_i32_1 = arith.constant 0 : i32
    return %c0_i32, %c0_i32_0 : i32, i32
  }
  func.func @transform_9(%arg0: i32) -> (i32, i32) {
    %c0_i32 = arith.constant 0 : i32
    %c0_i32_0 = arith.constant 0 : i32
    %c0_i32_1 = arith.constant 0 : i32
    return %c0_i32, %c0_i32_0 : i32, i32
  }
  func.func @transform_10(%arg0: i32) -> (i32, i32) {
    %c0_i32 = arith.constant 0 : i32
    %c0_i32_0 = arith.constant 0 : i32
    %c0_i32_1 = arith.constant 0 : i32
    return %c0_i32, %c0_i32_0 : i32, i32
  }
  func.func @transform_11(%arg0: i32) -> (i32, i32) {
    %c0_i32 = arith.constant 0 : i32
    %c0_i32_0 = arith.constant 0 : i32
    return %arg0, %c0_i32 : i32, i32
  }
}

</mosaic_0001>

<llo_original>
// kernel: tpu_custom_call.1
$region0: #{tpu_custom_call.1}
  #allocation0 [shape = 'u32[]', space=smem, size = 0x4, offset = 0x4, fixed_abs, tag = 'smem constant byte address 0x4 - core index']
  #allocation1 [shape = 'u32[144,128]{1,0:T(1,128)}', space=vmem, size = 0x12000, scoped, tag = 'internal scratch']
  #allocation2 [shape = 'f32[1,1]{1,0:T(1,128)S(1)}', space=vmem, size = 0x200, scoped, tag = 'scoped memory for tpu_custom_call.1']
  %s0 = inlined_call_operand.vmem [shape: f32[2,32], index: 0, kind: input, shape index: {}]
  %s1 = inlined_call_operand.hbm [shape: f32[16,32], index: 1, kind: input, shape index: {}]
  %s2 = inlined_call_operand.hbm [shape: f32[32,32], index: 2, kind: input, shape index: {}]
  %s3 = inlined_call_operand.hbm [shape: f32[32,32], index: 3, kind: input, shape index: {}]
  %s4 = inlined_call_operand.vmem [shape: f32[1,32], index: 4, kind: input, shape index: {}]
  %s5 = inlined_call_operand.hbm [shape: f32[32,32], index: 5, kind: input, shape index: {}]
  %s6 = inlined_call_operand.vmem [shape: f32[1,32], index: 6, kind: input, shape index: {}]
  %s7 = inlined_call_operand.hbm [shape: f32[32,32], index: 7, kind: input, shape index: {}]
  %s8 = inlined_call_operand.vmem [shape: f32[1,32], index: 8, kind: input, shape index: {}]
  %s9 = inlined_call_operand.vmem [shape: f32[1,32], index: 9, kind: input, shape index: {}]
  %s10 = inlined_call_operand.<no memory space> [shape: f32[1,1], index: 10, kind: input, shape index: {}]
  %s11 = inlined_call_operand.hbm [shape: f32[2,32], index: 11, kind: output, shape index: {}]
  %s12 = sld [smem:[#allocation0]]
  $region74: #{tpu_custom_call.1} parent=0
    _
  %s14 = ssub.s32 1, %s12
  %s15 = scalar_select 0, %s14, %s12
  %v16 = vstv %s10
  %17 = vst [vmem:[#allocation2] sm:$0x1] %v16
  $region1: #{tpu_custom_call.1} parent=0
    #allocation3 [shape = 'u8[8192]{0}', space=vmem, size = 0x2000, scoped, tag = 'input window, operand 1, single buffered']
    #allocation4 [shape = 's32[1]{0}', space=sflag, size = 0x4, scoped, tag = 'scoped memory for tpu_custom_call.1']
    #allocation5 [shape = 's32[1]{0}', space=sflag, size = 0x4, scoped, tag = 'scoped memory for tpu_custom_call.1']
    #allocation6 [shape = 'u8[16384]{0}', space=vmem, size = 0x4000, scoped, tag = 'input window, operand 2, single buffered']
    #allocation7 [shape = 's32[1]{0}', space=sflag, size = 0x4, scoped, tag = 'scoped memory for tpu_custom_call.1']
    #allocation8 [shape = 'u8[16384]{0}', space=vmem, size = 0x4000, scoped, tag = 'input window, operand 3, single buffered']
    #allocation9 [shape = 'u8[16384]{0}', space=vmem, size = 0x4000, scoped, tag = 'input window, operand 5, single buffered']
    #allocation10 [shape = 's32[1]{0}', space=sflag, size = 0x4, scoped, tag = 'scoped memory for tpu_custom_call.1']
    #allocation11 [shape = 'u8[16384]{0}', space=vmem, size = 0x4000, scoped, tag = 'input window, operand 7, single buffered']
    #allocation12 [shape = 'u8[1024]{0}', space=vmem, size = 0x400, scoped, tag = 'output window, operand 0, single buffered']
    %18 = vsyncpa [#allocation4], 0
    %19 = vsyncpa [#allocation7], 0
    %20 = vsyncpa [#allocation10], 0
    %21 = vsyncpa [#allocation5], 0
    // Predicated region
    $region2: #{tpu_custom_call.1} parent=1 // pred_check
      _
    $region3: #{tpu_custom_call.1} parent=1 // pred_check_branch
      %23 = sbr.rel (0) target = $region5
    $region4: #{tpu_custom_call.1} parent=1 // pred_region
      _
    $region5: #{tpu_custom_call.1} parent=1 // pred_fallthru
      _
    // Predicated region
    $region6: #{tpu_custom_call.1} parent=1 // pred_check
      _
    $region7: #{tpu_custom_call.1} parent=1 // pred_check_branch
      %25 = sbr.rel (0) target = $region9
    $region8: #{tpu_custom_call.1} parent=1 // pred_region
      %s27 = ssub.s32 256, 256
      %28 = vsyncadd [#allocation4], %s27
      %s29 = sshll.u32 [#allocation3], 4
      %s30 = int_to_ptr.vmem [resolvable:$true] %s29
      %35 = dma.hbm_to_vmem [thread:$0]  %s1, 256, %s30, [#allocation4], 128, 128, 8
    $region9: #{tpu_custom_call.1} parent=1 // pred_fallthru
      _
    // Predicated region
    $region10: #{tpu_custom_call.1} parent=1 // pred_check
      _
    $region11: #{tpu_custom_call.1} parent=1 // pred_check_branch
      %37 = sbr.rel (0) target = $region13
    $region12: #{tpu_custom_call.1} parent=1 // pred_region
      %s39 = ssub.s32 512, 512
      %40 = vsyncadd [#allocation7], %s39
      %s41 = sshll.u32 [#allocation6], 4
      %s42 = int_to_ptr.vmem [resolvable:$true] %s41
      %47 = dma.hbm_to_vmem [thread:$0]  %s2, 512, %s42, [#allocation7], 128, 128, 8
    $region13: #{tpu_custom_call.1} parent=1 // pred_fallthru
      _
    // Predicated region
    $region14: #{tpu_custom_call.1} parent=1 // pred_check
      _
    $region15: #{tpu_custom_call.1} parent=1 // pred_check_branch
      %49 = sbr.rel (0) target = $region17
    $region16: #{tpu_custom_call.1} parent=1 // pred_region
      %s51 = ssub.s32 512, 512
      %52 = vsyncadd [#allocation7], %s51
      %s53 = sshll.u32 [#allocation8], 4
      %s54 = int_to_ptr.vmem [resolvable:$true] %s53
      %59 = dma.hbm_to_vmem [thread:$0]  %s3, 512, %s54, [#allocation7], 128, 128, 8
    $region17: #{tpu_custom_call.1} parent=1 // pred_fallthru
      _
    // Predicated region
    $region18: #{tpu_custom_call.1} parent=1 // pred_check
      _
    $region19: #{tpu_custom_call.1} parent=1 // pred_check_branch
      %61 = sbr.rel (0) target = $region21
    $region20: #{tpu_custom_call.1} parent=1 // pred_region
      _
    $region21: #{tpu_custom_call.1} parent=1 // pred_fallthru
      _
    // Predicated region
    $region22: #{tpu_custom_call.1} parent=1 // pred_check
      _
    $region23: #{tpu_custom_call.1} parent=1 // pred_check_branch
      %63 = sbr.rel (0) target = $region25
    $region24: #{tpu_custom_call.1} parent=1 // pred_region
      %s65 = ssub.s32 512, 512
      %66 = vsyncadd [#allocation10], %s65
      %s67 = sshll.u32 [#allocation9], 4
      %s68 = int_to_ptr.vmem [resolvable:$true] %s67
      %73 = dma.hbm_to_vmem [thread:$0]  %s5, 512, %s68, [#allocation10], 128, 128, 8
    $region25: #{tpu_custom_call.1} parent=1 // pred_fallthru
      _
    // Predicated region
    $region26: #{tpu_custom_call.1} parent=1 // pred_check
      _
    $region27: #{tpu_custom_call.1} parent=1 // pred_check_branch
      %75 = sbr.rel (0) target = $region29
    $region28: #{tpu_custom_call.1} parent=1 // pred_region
      _
    $region29: #{tpu_custom_call.1} parent=1 // pred_fallthru
      _
    // Predicated region
    $region30: #{tpu_custom_call.1} parent=1 // pred_check
      _
    $region31: #{tpu_custom_call.1} parent=1 // pred_check_branch
      %77 = sbr.rel (0) target = $region33
    $region32: #{tpu_custom_call.1} parent=1 // pred_region
      %s79 = ssub.s32 512, 512
      %80 = vsyncadd [#allocation10], %s79
      %s81 = sshll.u32 [#allocation11], 4
      %s82 = int_to_ptr.vmem [resolvable:$true] %s81
      %87 = dma.hbm_to_vmem [thread:$0]  %s7, 512, %s82, [#allocation10], 128, 128, 8
    $region33: #{tpu_custom_call.1} parent=1 // pred_fallthru
      _
    // Predicated region
    $region34: #{tpu_custom_call.1} parent=1 // pred_check
      _
    $region35: #{tpu_custom_call.1} parent=1 // pred_check_branch
      %89 = sbr.rel (0) target = $region37
    $region36: #{tpu_custom_call.1} parent=1 // pred_region
      _
    $region37: #{tpu_custom_call.1} parent=1 // pred_fallthru
      _
    // Predicated region
    $region38: #{tpu_custom_call.1} parent=1 // pred_check
      _
    $region39: #{tpu_custom_call.1} parent=1 // pred_check_branch
      %91 = sbr.rel (0) target = $region41
    $region40: #{tpu_custom_call.1} parent=1 // pred_region
      _
    $region41: #{tpu_custom_call.1} parent=1 // pred_fallthru
      _
    // Predicated region
    $region42: #{tpu_custom_call.1} parent=1 // pred_check
      _
    $region43: #{tpu_custom_call.1} parent=1 // pred_check_branch
      %93 = sbr.rel (0) target = $region45
    $region44: #{tpu_custom_call.1} parent=1 // pred_region
      _
    $region45: #{tpu_custom_call.1} parent=1 // pred_fallthru
      _
    // Predicated region
    $region46: #{tpu_custom_call.1} parent=1 // pred_check
      _
    $region47: #{tpu_custom_call.1} parent=1 // pred_check_branch
      %95 = sbr.rel (0) target = $region49
    $region48: #{tpu_custom_call.1} parent=1 // pred_region
      %96 = dma.done [#allocation4], 256
    $region49: #{tpu_custom_call.1} parent=1 // pred_fallthru
      _
    // Predicated region
    $region50: #{tpu_custom_call.1} parent=1 // pred_check
      _
    $region51: #{tpu_custom_call.1} parent=1 // pred_check_branch
      %98 = sbr.rel (0) target = $region53
    $region52: #{tpu_custom_call.1} parent=1 // pred_region
      %99 = dma.done [#allocation7], 512
    $region53: #{tpu_custom_call.1} parent=1 // pred_fallthru
      _
    // Predicated region
    $region54: #{tpu_custom_call.1} parent=1 // pred_check
      _
    $region55: #{tpu_custom_call.1} parent=1 // pred_check_branch
      %101 = sbr.rel (0) target = $region57
    $region56: #{tpu_custom_call.1} parent=1 // pred_region
      %102 = dma.done [#allocation7], 512
    $region57: #{tpu_custom_call.1} parent=1 // pred_fallthru
      _
    // Predicated region
    $region58: #{tpu_custom_call.1} parent=1 // pred_check
      _
    $region59: #{tpu_custom_call.1} parent=1 // pred_check_branch
      %104 = sbr.rel (0) target = $region61
    $region60: #{tpu_custom_call.1} parent=1 // pred_region
      %105 = dma.done [#allocation10], 512
    $region61: #{tpu_custom_call.1} parent=1 // pred_fallthru
      _
    // Predicated region
    $region62: #{tpu_custom_call.1} parent=1 // pred_check
      _
    $region63: #{tpu_custom_call.1} parent=1 // pred_check_branch
      %107 = sbr.rel (0) target = $region65
    $region64: #{tpu_custom_call.1} parent=1 // pred_region
      %108 = dma.done [#allocation10], 512
    $region65: #{tpu_custom_call.1} parent=1 // pred_fallthru
      _
    %v109 = vld [vmem:[#allocation3] sm:$0xff]
    %v110 = vld [vmem:[#allocation3 + $0x8] sm:$0xff]
    %v111 = vld [vmem:[%s0] sm:$0x3]
    %v112 = vld [vmem:[#allocation8] sm:$0xff]
    %v113 = vld [vmem:[#allocation8 + $0x8] sm:$0xff]
    %v114 = vld [vmem:[#allocation8 + $0x10] sm:$0xff]
    %v115 = vld [vmem:[#allocation8 + $0x18] sm:$0xff]
    %v116 = vld [vmem:[%s4] sm:$0x1]
    %v118 = vlaneseq
    %v119 = vshrl.u32 %v118, 7
    %v120 = vsub.s32 0, %v119
    %v121 = vrot.slane %v116, %v120
    %vm123 = vcmask 261120
    %v125 = vsel %vm123, %v111, 0
    %127 = vmatprep.subr.mxu0 0.0
    %128 = vmatpush1.msra.mxu0 0.0
    %129 = vmatprep.subr.mxu0 0.0
    %130 = vmatpush1.msra.mxu0 0.0
    %131 = vmatprep.subr.mxu0 0.0
    %132 = vmatpush1.msra.mxu0 0.0
    %133 = vmatprep.subr.mxu0 0.0
    %134 = vmatpush1.msra.mxu0 0.0
    %135 = vmatprep.subr.mxu0 0.0
    %136 = vmatpush1.msra.mxu0 0.0
    %137 = vmatprep.subr.mxu0 0.0
    %138 = vmatpush1.msra.mxu0 0.0
    %139 = vmatprep.subr.mxu0 0.0
    %140 = vmatpush1.msra.mxu0 0.0
    %141 = vmatprep.subr.mxu0 0.0
    %142 = vmatpush1.msra.mxu0 0.0
    %143 = vmatprep.subr.mxu0 0.0
    %144 = vmatpush1.msra.mxu0 0.0
    %145 = vmatprep.subr.mxu0 0.0
    %146 = vmatpush1.msra.mxu0 0.0
    %147 = vmatprep.subr.mxu0 0.0
    %148 = vmatpush1.msra.mxu0 0.0
    %149 = vmatprep.subr.mxu0 0.0
    %150 = vmatpush1.msra.mxu0 0.0
    %151 = vmatprep.subr.mxu0 0.0
    %152 = vmatpush1.msra.mxu0 %v115
    %153 = vmatprep.subr.mxu0 0.0
    %154 = vmatpush1.msra.mxu0 %v114
    %155 = vmatprep.subr.mxu0 0.0
    %156 = vmatpush1.msra.mxu0 %v113
    %157 = vmatprep.subr.mxu0 0.0
    %158 = vmatpush1.msra.mxu0 %v112
    %159 = vmatprep.subr.mxu0 0.0
    %160 = vmatpush2.msra.mxu0 0.0
    %161 = vmatprep.subr.mxu0 0.0
    %162 = vmatpush2.msra.mxu0 0.0
    %163 = vmatprep.subr.mxu0 0.0
    %164 = vmatpush2.msra.mxu0 0.0
    %165 = vmatprep.subr.mxu0 0.0
    %166 = vmatpush2.msra.mxu0 0.0
    %167 = vmatprep.subr.mxu0 0.0
    %168 = vmatpush2.msra.mxu0 0.0
    %169 = vmatprep.subr.mxu0 0.0
    %170 = vmatpush2.msra.mxu0 0.0
    %171 = vmatprep.subr.mxu0 0.0
    %172 = vmatpush2.msra.mxu0 0.0
    %173 = vmatprep.subr.mxu0 0.0
    %174 = vmatpush2.msra.mxu0 0.0
    %175 = vmatprep.subr.mxu0 0.0
    %176 = vmatpush2.msra.mxu0 0.0
    %177 = vmatprep.subr.mxu0 0.0
    %178 = vmatpush2.msra.mxu0 0.0
    %179 = vmatprep.subr.mxu0 0.0
    %180 = vmatpush2.msra.mxu0 0.0
    %181 = vmatprep.subr.mxu0 0.0
    %182 = vmatpush2.msra.mxu0 0.0
    %183 = vmatprep.subr.mxu0 0.0
    %184 = vmatpush2.msra.mxu0 0.0
    %185 = vmatprep.subr.mxu0 0.0
    %186 = vmatpush2.msra.mxu0 0.0
    %187 = vmatprep.subr.mxu0 0.0
    %188 = vmatpush2.msra.mxu0 0.0
    %189 = vmatprep.subr.mxu0 0.0
    %190 = vmatpush2.msra.mxu0 0.0
    %191 = vmatprep.mubr.f32.mxu0 0.0
    %192 = vmatmul.mubr.f32.gmra.mxu0 %v125
    %v193 = vpop.f32.mrf.mxu0
    %v194 = vadd.f32 %v121, %v193
    %v195 = vpop.f32.mrf.mxu0
    %196 = vdwg.mxu0
    %v197 = vld [vmem:[#allocation6] sm:$0xff]
    %v198 = vld [vmem:[#allocation6 + $0x8] sm:$0xff]
    %v199 = vld [vmem:[#allocation6 + $0x10] sm:$0xff]
    %v200 = vld [vmem:[#allocation6 + $0x18] sm:$0xff]
    %v202 = vsel %vm123, %v109, 0
    %v205 = vsel %vm123, %v110, 0
    %207 = vmatprep.subr.mxu0 0.0
    %208 = vmatpush1.msra.mxu0 0.0
    %209 = vmatprep.subr.mxu0 0.0
    %210 = vmatpush1.msra.mxu0 0.0
    %211 = vmatprep.subr.mxu0 0.0
    %212 = vmatpush1.msra.mxu0 0.0
    %213 = vmatprep.subr.mxu0 0.0
    %214 = vmatpush1.msra.mxu0 0.0
    %215 = vmatprep.subr.mxu0 0.0
    %216 = vmatpush1.msra.mxu0 0.0
    %217 = vmatprep.subr.mxu0 0.0
    %218 = vmatpush1.msra.mxu0 0.0
    %219 = vmatprep.subr.mxu0 0.0
    %220 = vmatpush1.msra.mxu0 0.0
    %221 = vmatprep.subr.mxu0 0.0
    %222 = vmatpush1.msra.mxu0 0.0
    %223 = vmatprep.subr.mxu0 0.0
    %224 = vmatpush1.msra.mxu0 0.0
    %225 = vmatprep.subr.mxu0 0.0
    %226 = vmatpush1.msra.mxu0 0.0
    %227 = vmatprep.subr.mxu0 0.0
    %228 = vmatpush1.msra.mxu0 0.0
    %229 = vmatprep.subr.mxu0 0.0
    %230 = vmatpush1.msra.mxu0 0.0
    %231 = vmatprep.subr.mxu0 0.0
    %232 = vmatpush1.msra.mxu0 %v200
    %233 = vmatprep.subr.mxu0 0.0
    %234 = vmatpush1.msra.mxu0 %v199
    %235 = vmatprep.subr.mxu0 0.0
    %236 = vmatpush1.msra.mxu0 %v198
    %237 = vmatprep.subr.mxu0 0.0
    %238 = vmatpush1.msra.mxu0 %v197
    %239 = vmatprep.subr.mxu0 0.0
    %240 = vmatpush2.msra.mxu0 0.0
    %241 = vmatprep.subr.mxu0 0.0
    %242 = vmatpush2.msra.mxu0 0.0
    %243 = vmatprep.subr.mxu0 0.0
    %244 = vmatpush2.msra.mxu0 0.0
    %245 = vmatprep.subr.mxu0 0.0
    %246 = vmatpush2.msra.mxu0 0.0
    %247 = vmatprep.subr.mxu0 0.0
    %248 = vmatpush2.msra.mxu0 0.0
    %249 = vmatprep.subr.mxu0 0.0
    %250 = vmatpush2.msra.mxu0 0.0
    %251 = vmatprep.subr.mxu0 0.0
    %252 = vmatpush2.msra.mxu0 0.0
    %253 = vmatprep.subr.mxu0 0.0
    %254 = vmatpush2.msra.mxu0 0.0
    %255 = vmatprep.subr.mxu0 0.0
    %256 = vmatpush2.msra.mxu0 0.0
    %257 = vmatprep.subr.mxu0 0.0
    %258 = vmatpush2.msra.mxu0 0.0
    %259 = vmatprep.subr.mxu0 0.0
    %260 = vmatpush2.msra.mxu0 0.0
    %261 = vmatprep.subr.mxu0 0.0
    %262 = vmatpush2.msra.mxu0 0.0
    %263 = vmatprep.subr.mxu0 0.0
    %264 = vmatpush2.msra.mxu0 0.0
    %265 = vmatprep.subr.mxu0 0.0
    %266 = vmatpush2.msra.mxu0 0.0
    %267 = vmatprep.subr.mxu0 0.0
    %268 = vmatpush2.msra.mxu0 0.0
    %269 = vmatprep.subr.mxu0 0.0
    %270 = vmatpush2.msra.mxu0 0.0
    %271 = vmatprep.mubr.f32.mxu0 0.0
    %272 = vmatmul.mubr.f32.gmra.mxu0 %v202
    %v273 = vpop.f32.mrf.mxu0
    %v274 = vadd.f32 0.0, %v273
    %v275 = vpop.f32.mrf.mxu0
    %276 = vmatprep.mubr.f32.mxu0 0.0
    %277 = vmatmul.mubr.f32.gmra.mxu0 %v205
    %v278 = vpop.f32.mrf.mxu0
    %v279 = vadd.f32 0.0, %v278
    %v280 = vpop.f32.mrf.mxu0
    %281 = vdwg.mxu0
    %v284 = vunpack.c.l.s4 1966171168
    %v285 = vunpack.c.0.s8 %v284
    %v286 = vlaneseq
    %v287 = vshrl.u32 %v286, 7
    %v288 = vsub.s32 %v285, %v287
    %v289 = vrot.slane %v194, %v288
    %v290 = vcombine.high %v289, %v289
    %v292 = vunpack.c.l.s4 1966171168
    %v293 = vunpack.c.0.s8 %v292
    %v294 = vlaneseq
    %v295 = vshrl.u32 %v294, 7
    %v296 = vsub.s32 %v293, %v295
    %v297 = vrot.slane %v289, %v296
    %v299 = vunpack.c.l.s4 1966171168
    %v300 = vunpack.c.0.s8 %v299
    %v301 = vlaneseq
    %v302 = vshrl.u32 %v301, 7
    %v303 = vsub.s32 %v300, %v302
    %v304 = vrot.slane %v290, %v303
    %v305 = vlaneseq
    %v306 = vshrl.u32 %v305, 7
    %v307 = vsub.s32 0, %v306
    %v308 = vrot.slane %v297, %v307
    %v309 = vlaneseq
    %v310 = vshrl.u32 %v309, 7
    %v311 = vsub.s32 0, %v310
    %v312 = vrot.slane %v304, %v311
    %v315 = vadd.f32 %v274, %v308
    %v316 = vadd.f32 %v279, %v312
    %v317 = vld [vmem:[#allocation9] sm:$0xff]
    %v318 = vld [vmem:[#allocation9 + $0x8] sm:$0xff]
    %v319 = vld [vmem:[#allocation9 + $0x10] sm:$0xff]
    %v320 = vld [vmem:[#allocation9 + $0x18] sm:$0xff]
    %v321 = vld [vmem:[%s6] sm:$0x1]
    %v323 = vlaneseq
    %v324 = vshrl.u32 %v323, 7
    %v325 = vsub.s32 0, %v324
    %v326 = vrot.slane %v321, %v325
    %v329 = vsel %vm123, %v315, 0
    %v332 = vsel %vm123, %v316, 0
    %334 = vmatprep.subr.mxu0 0.0
    %335 = vmatpush1.msra.mxu0 0.0
    %336 = vmatprep.subr.mxu0 0.0
    %337 = vmatpush1.msra.mxu0 0.0
    %338 = vmatprep.subr.mxu0 0.0
    %339 = vmatpush1.msra.mxu0 0.0
    %340 = vmatprep.subr.mxu0 0.0
    %341 = vmatpush1.msra.mxu0 0.0
    %342 = vmatprep.subr.mxu0 0.0
    %343 = vmatpush1.msra.mxu0 0.0
    %344 = vmatprep.subr.mxu0 0.0
    %345 = vmatpush1.msra.mxu0 0.0
    %346 = vmatprep.subr.mxu0 0.0
    %347 = vmatpush1.msra.mxu0 0.0
    %348 = vmatprep.subr.mxu0 0.0
    %349 = vmatpush1.msra.mxu0 0.0
    %350 = vmatprep.subr.mxu0 0.0
    %351 = vmatpush1.msra.mxu0 0.0
    %352 = vmatprep.subr.mxu0 0.0
    %353 = vmatpush1.msra.mxu0 0.0
    %354 = vmatprep.subr.mxu0 0.0
    %355 = vmatpush1.msra.mxu0 0.0
    %356 = vmatprep.subr.mxu0 0.0
    %357 = vmatpush1.msra.mxu0 0.0
    %358 = vmatprep.subr.mxu0 0.0
    %359 = vmatpush1.msra.mxu0 %v320
    %360 = vmatprep.subr.mxu0 0.0
    %361 = vmatpush1.msra.mxu0 %v319
    %362 = vmatprep.subr.mxu0 0.0
    %363 = vmatpush1.msra.mxu0 %v318
    %364 = vmatprep.subr.mxu0 0.0
    %365 = vmatpush1.msra.mxu0 %v317
    %366 = vmatprep.subr.mxu0 0.0
    %367 = vmatpush2.msra.mxu0 0.0
    %368 = vmatprep.subr.mxu0 0.0
    %369 = vmatpush2.msra.mxu0 0.0
    %370 = vmatprep.subr.mxu0 0.0
    %371 = vmatpush2.msra.mxu0 0.0
    %372 = vmatprep.subr.mxu0 0.0
    %373 = vmatpush2.msra.mxu0 0.0
    %374 = vmatprep.subr.mxu0 0.0
    %375 = vmatpush2.msra.mxu0 0.0
    %376 = vmatprep.subr.mxu0 0.0
    %377 = vmatpush2.msra.mxu0 0.0
    %378 = vmatprep.subr.mxu0 0.0
    %379 = vmatpush2.msra.mxu0 0.0
    %380 = vmatprep.subr.mxu0 0.0
    %381 = vmatpush2.msra.mxu0 0.0
    %382 = vmatprep.subr.mxu0 0.0
    %383 = vmatpush2.msra.mxu0 0.0
    %384 = vmatprep.subr.mxu0 0.0
    %385 = vmatpush2.msra.mxu0 0.0
    %386 = vmatprep.subr.mxu0 0.0
    %387 = vmatpush2.msra.mxu0 0.0
    %388 = vmatprep.subr.mxu0 0.0
    %389 = vmatpush2.msra.mxu0 0.0
    %390 = vmatprep.subr.mxu0 0.0
    %391 = vmatpush2.msra.mxu0 0.0
    %392 = vmatprep.subr.mxu0 0.0
    %393 = vmatpush2.msra.mxu0 0.0
    %394 = vmatprep.subr.mxu0 0.0
    %395 = vmatpush2.msra.mxu0 0.0
    %396 = vmatprep.subr.mxu0 0.0
    %397 = vmatpush2.msra.mxu0 0.0
    %398 = vmatprep.mubr.f32.mxu0 0.0
    %399 = vmatmul.mubr.f32.gmra.mxu0 %v329
    %v400 = vpop.f32.mrf.mxu0
    %v401 = vadd.f32 %v326, %v400
    %v402 = vpop.f32.mrf.mxu0
    %403 = vmatprep.mubr.f32.mxu0 0.0
    %404 = vmatmul.mubr.f32.gmra.mxu0 %v332
    %v405 = vpop.f32.mrf.mxu0
    %v406 = vadd.f32 %v326, %v405
    %v407 = vpop.f32.mrf.mxu0
    %408 = vdwg.mxu0
    %v409 = vld [vmem:[#allocation11] sm:$0xff]
    %v410 = vld [vmem:[#allocation11 + $0x8] sm:$0xff]
    %v411 = vld [vmem:[#allocation11 + $0x10] sm:$0xff]
    %v412 = vld [vmem:[#allocation11 + $0x18] sm:$0xff]
    %v413 = vld [vmem:[%s8] sm:$0x1]
    %v415 = vlaneseq
    %v416 = vshrl.u32 %v415, 7
    %v417 = vsub.s32 0, %v416
    %v418 = vrot.slane %v413, %v417
    %v421 = vsel %vm123, %v401, 0
    %v424 = vsel %vm123, %v406, 0
    %426 = vmatprep.subr.mxu0 0.0
    %427 = vmatpush1.msra.mxu0 0.0
    %428 = vmatprep.subr.mxu0 0.0
    %429 = vmatpush1.msra.mxu0 0.0
    %430 = vmatprep.subr.mxu0 0.0
    %431 = vmatpush1.msra.mxu0 0.0
    %432 = vmatprep.subr.mxu0 0.0
    %433 = vmatpush1.msra.mxu0 0.0
    %434 = vmatprep.subr.mxu0 0.0
    %435 = vmatpush1.msra.mxu0 0.0
    %436 = vmatprep.subr.mxu0 0.0
    %437 = vmatpush1.msra.mxu0 0.0
    %438 = vmatprep.subr.mxu0 0.0
    %439 = vmatpush1.msra.mxu0 0.0
    %440 = vmatprep.subr.mxu0 0.0
    %441 = vmatpush1.msra.mxu0 0.0
    %442 = vmatprep.subr.mxu0 0.0
    %443 = vmatpush1.msra.mxu0 0.0
    %444 = vmatprep.subr.mxu0 0.0
    %445 = vmatpush1.msra.mxu0 0.0
    %446 = vmatprep.subr.mxu0 0.0
    %447 = vmatpush1.msra.mxu0 0.0
    %448 = vmatprep.subr.mxu0 0.0
    %449 = vmatpush1.msra.mxu0 0.0
    %450 = vmatprep.subr.mxu0 0.0
    %451 = vmatpush1.msra.mxu0 %v412
    %452 = vmatprep.subr.mxu0 0.0
    %453 = vmatpush1.msra.mxu0 %v411
    %454 = vmatprep.subr.mxu0 0.0
    %455 = vmatpush1.msra.mxu0 %v410
    %456 = vmatprep.subr.mxu0 0.0
    %457 = vmatpush1.msra.mxu0 %v409
    %458 = vmatprep.subr.mxu0 0.0
    %459 = vmatpush2.msra.mxu0 0.0
    %460 = vmatprep.subr.mxu0 0.0
    %461 = vmatpush2.msra.mxu0 0.0
    %462 = vmatprep.subr.mxu0 0.0
    %463 = vmatpush2.msra.mxu0 0.0
    %464 = vmatprep.subr.mxu0 0.0
    %465 = vmatpush2.msra.mxu0 0.0
    %466 = vmatprep.subr.mxu0 0.0
    %467 = vmatpush2.msra.mxu0 0.0
    %468 = vmatprep.subr.mxu0 0.0
    %469 = vmatpush2.msra.mxu0 0.0
    %470 = vmatprep.subr.mxu0 0.0
    %471 = vmatpush2.msra.mxu0 0.0
    %472 = vmatprep.subr.mxu0 0.0
    %473 = vmatpush2.msra.mxu0 0.0
    %474 = vmatprep.subr.mxu0 0.0
    %475 = vmatpush2.msra.mxu0 0.0
    %476 = vmatprep.subr.mxu0 0.0
    %477 = vmatpush2.msra.mxu0 0.0
    %478 = vmatprep.subr.mxu0 0.0
    %479 = vmatpush2.msra.mxu0 0.0
    %480 = vmatprep.subr.mxu0 0.0
    %481 = vmatpush2.msra.mxu0 0.0
    %482 = vmatprep.subr.mxu0 0.0
    %483 = vmatpush2.msra.mxu0 0.0
    %484 = vmatprep.subr.mxu0 0.0
    %485 = vmatpush2.msra.mxu0 0.0
    %486 = vmatprep.subr.mxu0 0.0
    %487 = vmatpush2.msra.mxu0 0.0
    %488 = vmatprep.subr.mxu0 0.0
    %489 = vmatpush2.msra.mxu0 0.0
    %490 = vmatprep.mubr.f32.mxu0 0.0
    %491 = vmatmul.mubr.f32.gmra.mxu0 %v421
    %v492 = vpop.f32.mrf.mxu0
    %v493 = vadd.f32 %v418, %v492
    %v494 = vpop.f32.mrf.mxu0
    %495 = vmatprep.mubr.f32.mxu0 0.0
    %496 = vmatmul.mubr.f32.gmra.mxu0 %v424
    %v497 = vpop.f32.mrf.mxu0
    %v498 = vadd.f32 %v418, %v497
    %v499 = vpop.f32.mrf.mxu0
    %500 = vdwg.mxu0
    %v501 = vld [vmem:[%s9] sm:$0x1]
    %v503 = vlaneseq
    %v504 = vshrl.u32 %v503, 7
    %v505 = vsub.s32 0, %v504
    %v506 = vrot.slane %v501, %v505
    %v508 = vmul.f32 %v493, %v506
    %v509 = vmul.f32 %v498, %v506
    %v510 = vsel %vm123, %v508, 0.0
    %511 = vadd.xlane.f32.xlu0 %v510
    %v512 = vpop.xlane.xlu0 %511
    %v513 = vsel %vm123, %v509, 0.0
    %514 = vadd.xlane.f32.xlu0 %v513
    %v515 = vpop.xlane.xlu0 %514
    %v516 = vld [vmem:[#allocation2] sm:$0x1]
    %v518 = vlaneseq
    %v519 = vshrl.u32 %v518, 7
    %v520 = vsub.s32 0, %v519
    %v521 = vrot.slane %v516, %v520
    %v523 = vadd.f32 %v512, %v521
    %v524 = vadd.f32 %v515, %v521
    %vm525 = vcmask 7168
    %v526 = vsel %vm525, %v523, -inf
    %v527 = vrot.slane %v526, 4
    %v528 = vmax.f32 %v526, %v527
    %v529 = vrot.slane %v528, 2
    %v530 = vmax.f32 %v528, %v529
    %v531 = vrot.slane %v530, 1
    %v532 = vmax.f32 %v530, %v531
    %v533 = vsel %vm525, %v524, -inf
    %v534 = vrot.slane %v533, 4
    %v535 = vmax.f32 %v533, %v534
    %v536 = vrot.slane %v535, 2
    %v537 = vmax.f32 %v535, %v536
    %v538 = vrot.slane %v537, 1
    %v539 = vmax.f32 %v537, %v538
    %v540 = vsub.f32 %v523, %v532
    %v541 = vsub.f32 %v524, %v539
    %v542 = vmul.f32 %v540, 1.442695
    %v543 = vpow.pop %v542
    %v544 = vmul.f32 %v541, 1.442695
    %v545 = vpow.pop %v544
    %v546 = vsel %vm525, %v543, 0.0
    %v547 = vrot.slane %v546, 4
    %v548 = vadd.f32 %v546, %v547
    %v549 = vrot.slane %v548, 2
    %v550 = vadd.f32 %v548, %v549
    %v551 = vrot.slane %v550, 1
    %v552 = vadd.f32 %v550, %v551
    %v553 = vsel %vm525, %v545, 0.0
    %v554 = vrot.slane %v553, 4
    %v555 = vadd.f32 %v553, %v554
    %v556 = vrot.slane %v555, 2
    %v557 = vadd.f32 %v555, %v556
    %v558 = vrot.slane %v557, 1
    %v559 = vadd.f32 %v557, %v558
    %v560 = vrcp.pop %v552
    %v561 = vmul.f32 %v543, %v560
    %v562 = vrcp.pop %v559
    %v563 = vmul.f32 %v545, %v562
    %565 = vset.pattern.permute.xlu0 0
    %566 = vperm.xlu0 %565, %v561
    %v567 = vpop.permute.xlu0 %566
    %570 = vset.pattern.permute.xlu0 0
    %571 = vperm.xlu0 %570, %v563
    %v572 = vpop.permute.xlu0 %571
    %v574 = vmul.f32 %v567, %v109
    %v575 = vmul.f32 %v572, %v110
    %v576 = vsel %vm123, %v574, 0.0
    %v577 = vrot.slane %v576, 4
    %v578 = vadd.f32 %v576, %v577
    %v579 = vrot.slane %v578, 2
    %v580 = vadd.f32 %v578, %v579
    %v581 = vrot.slane %v580, 1
    %v582 = vadd.f32 %v580, %v581
    %v583 = vsel %vm123, %v575, 0.0
    %v584 = vrot.slane %v583, 4
    %v585 = vadd.f32 %v583, %v584
    %v586 = vrot.slane %v585, 2
    %v587 = vadd.f32 %v585, %v586
    %v588 = vrot.slane %v587, 1
    %v589 = vadd.f32 %v587, %v588
    %vm592 = vcmask 1041409
    %v593 = vsel %vm592, %v589, %v582
    %vm595 = vcmask 254976
    %596 = vst.msk [vmem:[#allocation12] sm:$0x3] %vm595, %v593
    // Predicated region
    $region66: #{tpu_custom_call.1} parent=1 // pred_check
      _
    $region67: #{tpu_custom_call.1} parent=1 // pred_check_branch
      %598 = sbr.rel (0) target = $region69
    $region68: #{tpu_custom_call.1} parent=1 // pred_region
      %s600 = ssub.s32 32, 32
      %601 = vsyncadd [#allocation5], %s600
      %s603 = sshll.u32 [#allocation12], 4
      %s604 = int_to_ptr.vmem [resolvable:$true] %s603
      %606 = dma.vmem_to_hbm [thread:$0]  %s604, 32, %s11, [#allocation5]
    $region69: #{tpu_custom_call.1} parent=1 // pred_fallthru
      _
    // Predicated region
    $region70: #{tpu_custom_call.1} parent=1 // pred_check
      _
    $region71: #{tpu_custom_call.1} parent=1 // pred_check_branch
      %608 = sbr.rel (0) target = $region73
    $region72: #{tpu_custom_call.1} parent=1 // pred_region
      %609 = dma.done [#allocation5], 32
    $region73: #{tpu_custom_call.1} parent=1 // pred_fallthru
      _
    %610 = vsyncpa [#allocation4], 1
    %611 = vsyncpa [#allocation7], 1
    %612 = vsyncpa [#allocation10], 1
    %613 = vsyncpa [#allocation5], 1

</llo_original>
